<compile_context>
chip_gen: v5e
topology: v5e:2x2
jax: 0.10.0
libtpu: 0.0.40
codegen_flags: <defaults>
</compile_context>

<pallas_src>
import functools

import jax
import jax.numpy as jnp
from jax.experimental import pallas as pl
from jax.experimental.pallas import tpu as pltpu


_MASK_VALUE = -1e30


# -----------------------------------------------------------------------------
# Per-generation tuning + feature probes
# -----------------------------------------------------------------------------
@functools.lru_cache(maxsize=None)
def _tpu_defaults():
    """Best-effort per-generation tuning: (default attention tile, vmem limit)."""
    vmem_cap = 128 * 1024 * 1024            # v5e / v6e physical VMEM
    block = 256                             # v6e / v7x: feed the 256-wide MXU
    try:
        info = pltpu.get_tpu_info()
        vmem_cap = int(getattr(info, "vmem_capacity_bytes", vmem_cap))
        name = str(getattr(info, "chip_version", info)).lower()
        if "v5" in name or "5e" in name or "5p" in name:
            block = 128                     # v5e MXU is 4x128x128
    except Exception:                       # hardware query only; never used to
        pass                                # hide kernel compile errors
    # ~75% of physical VMEM, capped at 96 MiB (=> ~48 MiB on v7x's 64 MiB).
    return block, min((vmem_cap * 3) // 4, 96 * 1024 * 1024)


@functools.lru_cache(maxsize=None)
def _single_buffer_supported():
    """Feature-probe pl.Buffered(1) on a trivial kernel so real kernel builds
    never need a broad try/except that could mask genuine lowering errors."""
    if not hasattr(pl, "Buffered"):
        return False

    def _probe(x_ref, o_ref):
        o_ref[...] = x_ref[...]

    try:
        spec = pl.BlockSpec((8, 128), lambda i: (0, 0),
                            pipeline_mode=pl.Buffered(1))
        pl.pallas_call(
            _probe,
            out_shape=jax.ShapeDtypeStruct((8, 128), jnp.float32),
            grid=(1,),
            in_specs=[spec],
            out_specs=pl.BlockSpec((8, 128), lambda i: (0, 0)),
        )(jnp.zeros((8, 128), jnp.float32))
        return True
    except Exception:
        return False


def _spec(block_shape, index_map, *, single_buffer=False):
    """BlockSpec; single_buffer requests pl.Buffered(1) (for grid-invariant /
    slowly-varying operands: saves one VMEM buffer each) when supported."""
    if single_buffer and _single_buffer_supported():
        return pl.BlockSpec(block_shape, index_map, pipeline_mode=pl.Buffered(1))
    return pl.BlockSpec(block_shape, index_map)


# -----------------------------------------------------------------------------
# Kernel 1: fused QKV projection -> lane-dense (B, S, 3H) slab
# -----------------------------------------------------------------------------
def _qkv_proj_kernel(x_ref, w_ref, out_ref, acc_ref):
    k = pl.program_id(2)

    @pl.when(k == 0)
    def _init():
        acc_ref[...] = jnp.zeros_like(acc_ref)

    acc_ref[...] += jnp.dot(x_ref[0], w_ref[...],
                            preferred_element_type=jnp.float32)

    @pl.when(k == pl.num_programs(2) - 1)
    def _store():
        out_ref[0] = acc_ref[...].astype(out_ref.dtype)


def qkv_proj_pallas(x, w_qkv, *, block_s=None, block_h=None):
    """x @ [Wq*scale | Wk | Wv] -> (B, S, 3H).  No head split here: kernel 2
    selects heads purely through its BlockSpec last-dim block index, so this
    kernel's output store is a plain unmasked lane-dense GEMM store."""
    B, S, H = x.shape
    assert w_qkv.shape == (H, 3 * H), "w_qkv must be (H, 3H)"
    if block_s is None:
        block_s = min(S, 256)
    if block_h is None:
        block_h = min(H, 512)          # reduction (K) tile over the H contraction
    assert S % block_s == 0, "S must be a multiple of block_s"
    assert H % block_h == 0, "H must be a multiple of block_h"

    _, vmem_limit = _tpu_defaults()
    grid_spec = pltpu.PrefetchScalarGridSpec(
        num_scalar_prefetch=0,
        grid=(B, S // block_s, H // block_h),          # reduction axis last
        in_specs=[
            pl.BlockSpec((1, block_s, block_h), lambda b, s, k: (b, s, k)),
            pl.BlockSpec((block_h, 3 * H), lambda b, s, k: (k, 0)),
        ],
        out_specs=pl.BlockSpec((1, block_s, 3 * H), lambda b, s, k: (b, s, 0)),
        scratch_shapes=[pltpu.VMEM((block_s, 3 * H), jnp.float32)],
    )
    return pl.pallas_call(
        _qkv_proj_kernel,
        out_shape=jax.ShapeDtypeStruct((B, S, 3 * H), x.dtype),
        grid_spec=grid_spec,
        compiler_params=pltpu.CompilerParams(
            dimension_semantics=("parallel", "parallel", "arbitrary"),
            vmem_limit_bytes=vmem_limit),
    )(x, w_qkv)


# -----------------------------------------------------------------------------
# Kernel 2: flash attention + per-head output projection + optional residual
# -----------------------------------------------------------------------------
def _flash_attn_kernel(q_ref, k_ref, v_ref, wo_ref, *refs,
                       block_q, block_k, use_add, approx_recip):
    if use_add:
        add_ref, out_ref, m_scr, l_scr, acc_scr, oacc_scr = refs
    else:
        out_ref, m_scr, l_scr, acc_scr, oacc_scr = refs
        add_ref = None

    qi = pl.program_id(1)
    h = pl.program_id(2)
    ki = pl.program_id(3)
    num_heads = pl.num_programs(2)
    num_kv = pl.num_programs(3)

    @pl.when(ki == 0)
    def _init_head_state():
        m_scr[...] = jnp.full_like(m_scr, -jnp.inf)
        l_scr[...] = jnp.zeros_like(l_scr)
        acc_scr[...] = jnp.zeros_like(acc_scr)

    @pl.when(jnp.logical_and(h == 0, ki == 0))
    def _init_output_acc():
        oacc_scr[...] = jnp.zeros_like(oacc_scr)

    def _softmax_step(apply_mask):
        q = q_ref[0]                     # (block_q, hd); 1/sqrt(hd) folded in Wq
        k = k_ref[0]                     # (block_k, hd)
        v = v_ref[0]                     # (block_k, hd)
        # Contract on head_dim directly: no K transpose through the XLU.
        s = jax.lax.dot_general(q, k, (((1,), (1,)), ((), ())),
                                preferred_element_type=jnp.float32)
        if apply_mask:
            row = qi * block_q + jax.lax.broadcasted_iota(jnp.int32, s.shape, 0)
            col = ki * block_k + jax.lax.broadcasted_iota(jnp.int32, s.shape, 1)
            s = jnp.where(row >= col, s, _MASK_VALUE)
        m_prev = m_scr[...]
        m_new = jnp.maximum(m_prev, jnp.max(s, axis=-1, keepdims=True))
        alpha = jnp.exp(m_prev - m_new)
        p = jnp.exp(s - m_new)
        l_scr[...] = alpha * l_scr[...] + jnp.sum(p, axis=-1, keepdims=True)
        acc_scr[...] = alpha * acc_scr[...] + jnp.dot(
            p.astype(v.dtype), v, preferred_element_type=jnp.float32)
        m_scr[...] = m_new

    # Causal block classification.  Fully-above-diagonal blocks are skipped
    # entirely (their K/V DMAs are also skipped via the clamped kv index_map);
    # the iota/compare/select mask only runs on diagonal-straddling blocks.
    needs_compute = ki * block_k < (qi + 1) * block_q
    fully_unmasked = (ki + 1) * block_k - 1 <= qi * block_q

    @pl.when(jnp.logical_and(needs_compute, fully_unmasked))
    def _below_diag():
        _softmax_step(apply_mask=False)

    @pl.when(jnp.logical_and(needs_compute, jnp.logical_not(fully_unmasked)))
    def _on_diag():
        _softmax_step(apply_mask=True)

    # Per-head finalize: one normalization of the (block_q, hd) context (far
    # cheaper than normalizing the probabilities) and fold this head straight
    # into the output-projection accumulator -- no head concatenation.
    @pl.when(ki == num_kv - 1)
    def _finalize_head():
        ctx = (acc_scr[...] *
               pl.reciprocal(l_scr[...], approx=approx_recip)).astype(wo_ref.dtype)
        oacc_scr[...] += jnp.dot(ctx, wo_ref[0],
                                 preferred_element_type=jnp.float32)

    @pl.when(jnp.logical_and(h == num_heads - 1, ki == num_kv - 1))
    def _write_output():
        result = oacc_scr[...]
        if add_ref is not None:          # fused AttnWrapper residual add
            result = result + add_ref[0].astype(jnp.float32)
        out_ref[0] = result.astype(out_ref.dtype)


def flash_attention_o_pallas(qkv, wo_heads, add=None, *, num_heads,
                             block_q=None, block_k=None):
    B, S, three_h = qkv.shape
    assert three_h % 3 == 0
    H = three_h // 3
    assert H % num_heads == 0
    head_dim = H // num_heads

    default_block, vmem_limit = _tpu_defaults()
    if block_q is None:
        block_q = min(S, default_block)
    if block_k is None:
        block_k = min(S, default_block)
    assert S % block_q == 0 and S % block_k == 0

    use_add = add is not None
    # EUP approximate reciprocal is below bf16 rounding noise; keep the exact
    # one for f32 inputs so the f32 path stays tight vs the reference.
    approx_recip = qkv.dtype == jnp.bfloat16

    kernel = functools.partial(_flash_attn_kernel,
                               block_q=block_q, block_k=block_k,
                               use_add=use_add, approx_recip=approx_recip)

    nh = num_heads
    # Q/K/V are head_dim-wide last-dim blocks of the (B, S, 3H) slab:
    #   Q head h -> block h, K head h -> block nh + h, V head h -> block 2nh + h
    q_spec = _spec((1, block_q, head_dim),
                   lambda b, qi, h, ki: (b, qi, h), single_buffer=True)

    def _kv_block(qi, ki):
        # Clamp above-diagonal iterations to the last block this q-tile needs;
        # the block index then equals the previous step's, so Pallas skips the
        # otherwise-wasted K/V HBM->VMEM DMA for fully-masked blocks.
        return jnp.minimum(ki, ((qi + 1) * block_q - 1) // block_k)

    k_spec = pl.BlockSpec((1, block_k, head_dim),
                          lambda b, qi, h, ki: (b, _kv_block(qi, ki), nh + h))
    v_spec = pl.BlockSpec((1, block_k, head_dim),
                          lambda b, qi, h, ki: (b, _kv_block(qi, ki), 2 * nh + h))
    wo_spec = _spec((1, head_dim, H), lambda b, qi, h, ki: (h, 0, 0),
                    single_buffer=True)
    out_spec = pl.BlockSpec((1, block_q, H), lambda b, qi, h, ki: (b, qi, 0))

    in_specs = [q_spec, k_spec, v_spec, wo_spec]
    args = [qkv, qkv, qkv, wo_heads]
    if use_add:
        in_specs.append(_spec((1, block_q, H), lambda b, qi, h, ki: (b, qi, 0),
                              single_buffer=True))
        args.append(add)

    grid_spec = pltpu.PrefetchScalarGridSpec(
        num_scalar_prefetch=0,
        grid=(B, S // block_q, num_heads, S // block_k),
        in_specs=in_specs,
        out_specs=out_spec,
        scratch_shapes=[
            pltpu.VMEM((block_q, 1), jnp.float32),          # running max  m
            pltpu.VMEM((block_q, 1), jnp.float32),          # running sum  l
            pltpu.VMEM((block_q, head_dim), jnp.float32),   # per-head ctx acc
            pltpu.VMEM((block_q, H), jnp.float32),          # output-proj acc
        ])

    return pl.pallas_call(
        kernel,
        out_shape=jax.ShapeDtypeStruct((B, S, H), qkv.dtype),
        grid_spec=grid_spec,
        compiler_params=pltpu.CompilerParams(
            dimension_semantics=("parallel", "parallel",
                                 "arbitrary", "arbitrary"),
            vmem_limit_bytes=vmem_limit),
    )(*args)


# -----------------------------------------------------------------------------
# Wrapper (matches the PyTorch AttnWrapper semantics)
# -----------------------------------------------------------------------------
class AttnWrapper:
    """JAX/Pallas port of the PyTorch AttnWrapper.

    The wrapped `attn` module is modeled as plain causal multi-head
    self-attention with q/k/v/o projections (no bias)."""

    def __init__(self, wq, wk, wv, wo, num_heads):
        H = wq.shape[0]
        assert H % num_heads == 0
        self.num_heads = num_heads
        self.head_dim = H // num_heads
        # Fold 1/sqrt(head_dim) into Wq once (host side) and fuse [Wq|Wk|Wv]
        # into a single (H, 3H) weight: kernel 1 becomes one lane-dense MXU
        # matmul with no per-tile scaling multiply.
        scale = 1.0 / float(self.head_dim) ** 0.5
        self.w_qkv = jnp.concatenate([wq * scale, wk, wv], axis=1)
        # Output projection pre-split by head: [NH, head_dim, H] (contiguous
        # reshape, no transpose) so kernel 2 can accumulate ctx_h @ Wo_h.
        self.wo_heads = wo.reshape(num_heads, self.head_dim, H)
        self.activations = None
        self.add_tensor = None

    def forward(self, hidden_states, *, block_q=None, block_k=None,
                block_s=None, block_h=None):
        qkv = qkv_proj_pallas(hidden_states, self.w_qkv,
                              block_s=block_s, block_h=block_h)
        attn_out = flash_attention_o_pallas(
            qkv, self.wo_heads, self.add_tensor, num_heads=self.num_heads,
            block_q=block_q, block_k=block_k)
        output = (attn_out, None)               # (attn_output, attn_weights)
        self.activations = output[0]
        return output

    def reset(self):
        self.activations = None
        self.add_tensor = None


# -----------------------------------------------------------------------------
# Pure-JAX reference and demo
# -----------------------------------------------------------------------------
def _reference(x, wq, wk, wv, wo, add, num_heads):
    B, S, H = x.shape
    hd = H // num_heads
    q = (x @ wq).reshape(B, S, num_heads, hd).transpose(0, 2, 1, 3)
    k = (x @ wk).reshape(B, S, num_heads, hd).transpose(0, 2, 1, 3)
    v = (x @ wv).reshape(B, S, num_heads, hd).transpose(0, 2, 1, 3)
    scores = jnp.einsum("bhqd,bhkd->bhqk", q, k) / jnp.sqrt(hd).astype(x.dtype)
    mask = jnp.tril(jnp.ones((S, S), dtype=bool))
    scores = jnp.where(mask, scores, _MASK_VALUE)
    p = jax.nn.softmax(scores, axis=-1)
    ctx = jnp.einsum("bhqk,bhkd->bhqd", p, v).transpose(0, 2, 1, 3).reshape(B, S, H)
    out = ctx @ wo
    if add is not None:
        out = out + add
    return out


if __name__ == "__main__":
    # Small demo shapes with lane-aligned heads (head_dim = 128) so the
    # head-select BlockSpecs are clean lane-dense tiles.
    B, S, NH, HD = 2, 32, 2, 128
    H = NH * HD
    BQ = BK = 16        # multi-block grids: exercises the causal skip, the
    BS, BH = 16, 128    # masked/unmasked paths and kernel 1's K-reduction loop

    key = jax.random.PRNGKey(0)
    kx, kq, kk, kv, ko, ka = jax.random.split(key, 6)
    x = jax.random.normal(kx, (B, S, H), dtype=jnp.float32)
    wscale = 1.0 / (H ** 0.5)
    wq = jax.random.normal(kq, (H, H), dtype=jnp.float32) * wscale
    wk = jax.random.normal(kk, (H, H), dtype=jnp.float32) * wscale
    wv = jax.random.normal(kv, (H, H), dtype=jnp.float32) * wscale
    wo = jax.random.normal(ko, (H, H), dtype=jnp.float32) * wscale
    add_tensor = jax.random.normal(ka, (B, S, H), dtype=jnp.float32)

    wrapper = AttnWrapper(wq, wk, wv, wo, num_heads=NH)

    # 1) with the fused residual add
    wrapper.add_tensor = add_tensor
    out = wrapper.forward(x, block_q=BQ, block_k=BK, block_s=BS, block_h=BH)
    result = jax.block_until_ready(out[0])
    ref = _reference(x, wq, wk, wv, wo, add_tensor, NH)
    assert jnp.allclose(result, ref, atol=5e-4, rtol=5e-4), "mismatch (with add)"
    assert wrapper.activations is out[0]

    # 2) add_tensor = None path (no zero tensor is streamed from HBM)
    wrapper.reset()
    out2 = wrapper.forward(x, block_q=BQ, block_k=BK, block_s=BS, block_h=BH)
    result2 = jax.block_until_ready(out2[0])
    ref2 = _reference(x, wq, wk, wv, wo, None, NH)
    assert jnp.allclose(result2, ref2, atol=5e-4, rtol=5e-4), "mismatch (no add)"
    assert wrapper.activations is out2[0]

    print("KERNEL_OK")
</pallas_src>

<mosaic_0001>
module attributes {stable_mosaic.version = 11 : i64} {
  func.func @_qkv_proj_kernel(%arg0: i32, %arg1: i32, %arg2: i32, %arg3: memref<1x16x128xf32, #tpu.memory_space<vmem>>, %arg4: memref<128x768xf32, #tpu.memory_space<vmem>>, %arg5: memref<1x16x768xf32, #tpu.memory_space<vmem>>, %arg6: memref<16x768xf32, #tpu.memory_space<vmem>>) attributes {dimension_semantics = [#tpu.dimension_semantics<parallel>, #tpu.dimension_semantics<parallel>, #tpu.dimension_semantics<arbitrary>], iteration_bounds = array<i64: 2, 2, 2>, scalar_prefetch = 0 : i64, scratch_operands = 1 : i64, tpu.core_type = #tpu.core_type<tc>, window_params = [{transform_indices = @transform_0, window_bounds = array<i64: 1, 16, 128>}, {transform_indices = @transform_1, window_bounds = array<i64: 128, 768>}, {transform_indices = @transform_2, window_bounds = array<i64: 1, 16, 768>}]} {
    %c0_i32 = arith.constant 0 : i32
    %0 = arith.cmpi eq, %arg2, %c0_i32 : i32
    %1 = arith.extui %0 : i1 to i32
    %c0_i32_0 = arith.constant 0 : i32
    %2 = arith.cmpi ne, %1, %c0_i32_0 : i32
    scf.if %2 {
      %cst_10 = arith.constant 0.000000e+00 : f32
      %13 = vector.broadcast %cst_10 : f32 to vector<16x768xf32>
      %c0_11 = arith.constant 0 : index
      %c0_12 = arith.constant 0 : index
      %14 = vector.load %arg6[%c0_11, %c0_12] : memref<16x768xf32, #tpu.memory_space<vmem>>, vector<16x768xf32>
      tpu.vector_store %arg6[%c0_11, %c0_12], %13 {strides = array<i32>} : memref<16x768xf32, #tpu.memory_space<vmem>>, vector<16x768xf32>,
    } else {
    }
    %c0 = arith.constant 0 : index
    %c0_1 = arith.constant 0 : index
    %3 = vector.load %arg6[%c0, %c0_1] : memref<16x768xf32, #tpu.memory_space<vmem>>, vector<16x768xf32>
    %c0_2 = arith.constant 0 : index
    %c0_3 = arith.constant 0 : index
    %c0_4 = arith.constant 0 : index
    %4 = vector.load %arg3[%c0_2, %c0_3, %c0_4] : memref<1x16x128xf32, #tpu.memory_space<vmem>>, vector<1x16x128xf32>
    %5 = vector.shape_cast %4 : vector<1x16x128xf32> to vector<16x128xf32>
    %c0_5 = arith.constant 0 : index
    %c0_6 = arith.constant 0 : index
    %6 = vector.load %arg4[%c0_5, %c0_6] : memref<128x768xf32, #tpu.memory_space<vmem>>, vector<128x768xf32>
    %cst = arith.constant dense<0.000000e+00> : vector<16x768xf32>
    %7 = tpu.matmul %5, %6, %cst {dimension_numbers = #tpu.dot_dimension_numbers<[1], [0], [0], [1], [0, 0, 1, 1], [], []>} : vector<16x128xf32>, vector<128x768xf32>, vector<16x768xf32> -> vector<16x768xf32>
    %8 = arith.addf %3, %7 : vector<16x768xf32>
    %c0_7 = arith.constant 0 : index
    %c0_8 = arith.constant 0 : index
    %9 = vector.load %arg6[%c0_7, %c0_8] : memref<16x768xf32, #tpu.memory_space<vmem>>, vector<16x768xf32>
    tpu.vector_store %arg6[%c0_7, %c0_8], %8 {strides = array<i32>} : memref<16x768xf32, #tpu.memory_space<vmem>>, vector<16x768xf32>,
    %c1_i32 = arith.constant 1 : i32
    %10 = arith.cmpi eq, %arg2, %c1_i32 : i32
    %11 = arith.extui %10 : i1 to i32
    %c0_i32_9 = arith.constant 0 : i32
    %12 = arith.cmpi ne, %11, %c0_i32_9 : i32
    scf.if %12 {
      %c0_10 = arith.constant 0 : index
      %c0_11 = arith.constant 0 : index
      %13 = vector.load %arg6[%c0_10, %c0_11] : memref<16x768xf32, #tpu.memory_space<vmem>>, vector<16x768xf32>
      %c0_12 = arith.constant 0 : index
      %c0_13 = arith.constant 0 : index
      %c0_14 = arith.constant 0 : index
      %14 = vector.load %arg5[%c0_12, %c0_13, %c0_14] : memref<1x16x768xf32, #tpu.memory_space<vmem>>, vector<1x16x768xf32>
      %15 = vector.shape_cast %14 : vector<1x16x768xf32> to vector<16x768xf32>
      %16 = vector.shape_cast %13 : vector<16x768xf32> to vector<1x16x768xf32>
      tpu.vector_store %arg5[%c0_12, %c0_13, %c0_14], %16 {strides = array<i32>} : memref<1x16x768xf32, #tpu.memory_space<vmem>>, vector<1x16x768xf32>,
    } else {
    }
    return
  }
  func.func @transform_0(%arg0: i32, %arg1: i32, %arg2: i32) -> (i32, i32, i32) {
    %c0_i32 = arith.constant 0 : i32
    return %arg0, %arg1, %arg2 : i32, i32, i32
  }
  func.func @transform_1(%arg0: i32, %arg1: i32, %arg2: i32) -> (i32, i32) {
    %c0_i32 = arith.constant 0 : i32
    %c0_i32_0 = arith.constant 0 : i32
    return %arg2, %c0_i32 : i32, i32
  }
  func.func @transform_2(%arg0: i32, %arg1: i32, %arg2: i32) -> (i32, i32, i32) {
    %c0_i32 = arith.constant 0 : i32
    %c0_i32_0 = arith.constant 0 : i32
    return %arg0, %arg1, %c0_i32 : i32, i32, i32
  }
}

</mosaic_0001>

<llo_original>
// kernel: tpu_custom_call.1
$region0: #{tpu_custom_call.1}
  #allocation0 [shape = 'u32[]', space=smem, size = 0x4, offset = 0x4, fixed_abs, tag = 'smem constant byte address 0x4 - core index']
  #allocation1 [shape = 'u32[72,128]{1,0:T(1,128)}', space=vmem, size = 0x9000, scoped, tag = 'internal scratch']
  #allocation2 [shape = 'f32[16,768]{1,0:T(8,128)}', space=vmem, size = 0xc000, scoped, tag = 'scratch operand']
  %s0 = inlined_call_operand.hbm [shape: f32[2,32,256], index: 0, kind: input, shape index: {}]
  %s1 = inlined_call_operand.hbm [shape: f32[256,768], index: 1, kind: input, shape index: {}]
  %s2 = inlined_call_operand.hbm [shape: f32[2,32,768], index: 2, kind: output, shape index: {}]
  %s3 = sld [smem:[#allocation0]]
  $region57: #{tpu_custom_call.1} parent=0
    _
  %s5 = ssub.s32 1, %s3
  %s6 = scalar_select 0, %s5, %s3
  $region1: #{tpu_custom_call.1} parent=0
    #allocation3 [shape = 'u8[16384]{0}', space=vmem, size = 0x4000, scoped, tag = 'input window, operand 0']
    #allocation4 [shape = 's32[2]{0}', space=sflag, size = 0x8, scoped, tag = 'scoped memory for tpu_custom_call.1']
    #allocation5 [shape = 's32[2]{0}', space=sflag, size = 0x8, scoped, tag = 'scoped memory for tpu_custom_call.1']
    #allocation6 [shape = 'u8[786432]{0}', space=vmem, size = 0xc0000, scoped, tag = 'input window, operand 1']
    #allocation7 [shape = 's32[2]{0}', space=sflag, size = 0x8, scoped, tag = 'scoped memory for tpu_custom_call.1']
    #allocation8 [shape = 'u8[98304]{0}', space=vmem, size = 0x18000, scoped, tag = 'output window, operand 0']
    %7 = vsyncpa [#allocation4], 0
    %s8 = scalar_lea.sflag [#allocation4], 1
    %9 = vsyncpa %s8, 0
    %10 = vsyncpa [#allocation7], 0
    %s11 = scalar_lea.sflag [#allocation7], 1
    %12 = vsyncpa %s11, 0
    %13 = vsyncpa [#allocation5], 0
    %s14 = scalar_lea.sflag [#allocation5], 1
    %15 = vsyncpa %s14, 0
    loop: start=0, step=1, limit=10
    $region2: #{tpu_custom_call.1} parent=1 // loop_pre_header
      _
    $region3: #{tpu_custom_call.1} parent=1 // loop_header
      %s17 = sphi 0, %s21
      %p18 = scmp.ge.s32.totalorder %s17, 10
      %s24 = sphi 0, %s43
      %s25 = sphi 0, %s39
      %s26 = sphi 0, %s35
      %s27 = sphi 0, %s24
      %s28 = sphi 0, %s25
      %s29 = sphi 0, %s26
      %s30 = sphi 0, %s27
      %s31 = sphi 0, %s28
      %s32 = sphi 0, %s29
      %s50 = sphi 0, %s52
      %s53 = sphi 0, %s50
      %s54 = sphi 0, %s53
      %s70 = sphi 0, %s54
      %s76 = sphi 0, %s78
      %s79 = sphi 0, %s76
      %s80 = sphi 0, %s79
      %s96 = sphi 0, %s80
      %s104 = sphi 0, %s106
      %s107 = sphi 0, %s104
      %s108 = sphi 0, %s107
      %s124 = sphi 0, %s108
    $region4: #{tpu_custom_call.1} parent=1 // loop_header_branch
      %20 = sbr.rel (%p18) target = $region8
    $region5: #{tpu_custom_call.1} parent=1 // loop_body
      %s22 = ssub.s32 %s17, 1
      %s23 = ssub.s32 %s17, 2
      %s33 = sadd.s32 1, %s26
      %p34 = scmp.ge.s32.totalorder %s33, 2
      %s35 = scalar_select %p34, 0, %s33
      %s36 = sadd.s32 1, %s25
      %s37 = scalar_select %p34, %s36, %s25
      %p38 = scmp.ge.s32.totalorder %s37, 2
      %s39 = scalar_select %p38, 0, %s37
      %s40 = sadd.s32 1, %s24
      %s41 = scalar_select %p38, %s40, %s24
      %p42 = scmp.ge.s32.totalorder %s41, 2
      %s43 = scalar_select %p42, 0, %s41
      %s44 = ssub.s32 %s24, %s43
      %s45 = ssub.s32 %s25, %s39
      %s46 = sor.u32 %s44, %s45
      %s47 = ssub.s32 %s26, %s35
      %s48 = sor.u32 %s46, %s47
      %p49 = scmp.eq.s32.totalorder %s48, 0
      %s51 = sadd.s32 %s50, 1
      %s52 = scalar_select %p49, %s50, %s51
      %p55 = pneg %p49
      %p56 = scmp.eq.s32.totalorder %s17, 7
      %p57 = por %p55, %p56
      %p58 = scmp.ne.s32.totalorder %s50, %s53
      %p59 = scmp.eq.s32.totalorder %s17, 0
      %p60 = por %p58, %p59
      %p61 = scmp.ne.s32.totalorder %s50, %s53
      %p62 = scmp.eq.s32.totalorder %s22, 7
      %p63 = por %p61, %p62
      %p64 = scmp.ne.s32.totalorder %s53, %s54
      %p65 = scmp.eq.s32.totalorder %s22, 0
      %p66 = por %p64, %p65
      %p67 = scmp.ne.s32.totalorder %s53, %s54
      %p68 = scmp.eq.s32.totalorder %s23, 7
      %p69 = por %p67, %p68
      %p71 = scmp.ne.s32.totalorder %s54, %s70
      %p72 = scmp.eq.s32.totalorder %s23, 0
      %p73 = por %p71, %p72
      %s74 = ssub.s32 %s26, %s35
      %p75 = scmp.eq.s32.totalorder %s74, 0
      %s77 = sadd.s32 %s76, 1
      %s78 = scalar_select %p75, %s76, %s77
      %p81 = pneg %p75
      %p82 = scmp.eq.s32.totalorder %s17, 7
      %p83 = por %p81, %p82
      %p84 = scmp.ne.s32.totalorder %s76, %s79
      %p85 = scmp.eq.s32.totalorder %s17, 0
      %p86 = por %p84, %p85
      %p87 = scmp.ne.s32.totalorder %s76, %s79
      %p88 = scmp.eq.s32.totalorder %s22, 7
      %p89 = por %p87, %p88
      %p90 = scmp.ne.s32.totalorder %s79, %s80
      %p91 = scmp.eq.s32.totalorder %s22, 0
      %p92 = por %p90, %p91
      %p93 = scmp.ne.s32.totalorder %s79, %s80
      %p94 = scmp.eq.s32.totalorder %s23, 7
      %p95 = por %p93, %p94
      %p97 = scmp.ne.s32.totalorder %s80, %s96
      %p98 = scmp.eq.s32.totalorder %s23, 0
      %p99 = por %p97, %p98
      %s100 = ssub.s32 %s24, %s43
      %s101 = ssub.s32 %s25, %s39
      %s102 = sor.u32 %s100, %s101
      %p103 = scmp.eq.s32.totalorder %s102, 0
      %s105 = sadd.s32 %s104, 1
      %s106 = scalar_select %p103, %s104, %s105
      %p109 = pneg %p103
      %p110 = scmp.eq.s32.totalorder %s17, 7
      %p111 = por %p109, %p110
      %p112 = scmp.ne.s32.totalorder %s104, %s107
      %p113 = scmp.eq.s32.totalorder %s17, 0
      %p114 = por %p112, %p113
      %p115 = scmp.ne.s32.totalorder %s104, %s107
      %p116 = scmp.eq.s32.totalorder %s22, 7
      %p117 = por %p115, %p116
      %p118 = scmp.ne.s32.totalorder %s107, %s108
      %p119 = scmp.eq.s32.totalorder %s22, 0
      %p120 = por %p118, %p119
      %p121 = scmp.ne.s32.totalorder %s107, %s108
      %p122 = scmp.eq.s32.totalorder %s23, 7
      %p123 = por %p121, %p122
      %p125 = scmp.ne.s32.totalorder %s108, %s124
      %p126 = scmp.eq.s32.totalorder %s23, 0
      %p127 = por %p125, %p126
      %p128 = scmp.le.s32.totalorder 1, %s17
      %p129 = scmp.lt.s32.totalorder %s17, 9
      %p130 = pnand %p128, %p129
      %p131 = pneg %p130
      // Predicated region
      $region9: #{tpu_custom_call.1} parent=5 // pred_check
        _
      $region10: #{tpu_custom_call.1} parent=5 // pred_check_branch
        %133 = sbr.rel (%p130) target = $region12
      $region11: #{tpu_custom_call.1} parent=5 // pred_region
        %s134 = ssub.s32 %s17, 1
      $region12: #{tpu_custom_call.1} parent=5 // pred_fallthru
        _
      %p135 = scmp.lt.s32.totalorder %s17, 8
      // Predicated region
      $region13: #{tpu_custom_call.1} parent=5 // pred_check
        %p136 = pneg %p135
      $region14: #{tpu_custom_call.1} parent=5 // pred_check_branch
        %138 = sbr.rel (%p136) target = $region16
      $region15: #{tpu_custom_call.1} parent=5 // pred_region
        // Predicated region
        $region17: #{tpu_custom_call.1} parent=15 // pred_check
          %p139 = pneg %p60
        $region18: #{tpu_custom_call.1} parent=15 // pred_check_branch
          %141 = sbr.rel (%p139) target = $region20
        $region19: #{tpu_custom_call.1} parent=15 // pred_region
          %s142 = sand.u32 %s50, 1
          %s143 = scalar_lea.sflag [#allocation4], %s142
          %s144 = sand.u32 %s50, 1
          %s145 = smul.addr %s144, 16
          %s146 = scalar_lea.vmem [#allocation3], %s145
          %s147 = smul.u32 2, %s25
          %149 = vsyncadd %s143, 0
          %s150 = smul.addr %s147, 2
          %s151 = sadd.s32 %s26, %s150
          %s152 = smul.addr %s24, 8
          %s153 = sadd.s32 %s151, %s152
          %s154 = smul.addr %s153, 8
          %s155 = scalar_lea.hbm %s0, %s154
          %s156 = sshll.u32 %s155, 4
          %s157 = int_to_ptr.hbm [resolvable:$true] %s156
          %s158 = sshll.u32 %s146, 4
          %s159 = int_to_ptr.vmem [resolvable:$true] %s158
          %164 = dma.hbm_to_vmem [thread:$0]  %s157, 256, %s159, %s143, 256, 128, 8
        $region20: #{tpu_custom_call.1} parent=15 // pred_fallthru
          _
        // Predicated region
        $region21: #{tpu_custom_call.1} parent=15 // pred_check
          %p165 = pneg %p86
        $region22: #{tpu_custom_call.1} parent=15 // pred_check_branch
          %167 = sbr.rel (%p165) target = $region24
        $region23: #{tpu_custom_call.1} parent=15 // pred_region
          %s168 = sand.u32 %s76, 1
          %s169 = scalar_lea.sflag [#allocation7], %s168
          %s170 = sand.u32 %s76, 1
          %s171 = smul.addr %s170, 768
          %s172 = scalar_lea.vmem [#allocation6], %s171
          %s173 = smul.u32 16, %s26
          %175 = vsyncadd %s169, 0
          %s176 = smul.addr %s173, 6
          %s177 = smul.addr %s176, 8
          %s178 = scalar_lea.hbm %s1, %s177
          %s179 = sshll.u32 %s178, 4
          %s180 = int_to_ptr.hbm [resolvable:$true] %s179
          %s181 = sshll.u32 %s172, 4
          %s182 = int_to_ptr.vmem [resolvable:$true] %s181
          %187 = dma.hbm_to_vmem [thread:$0]  %s180, 12288, %s182, %s169, 768, 768, 48
        $region24: #{tpu_custom_call.1} parent=15 // pred_fallthru
          _
      $region16: #{tpu_custom_call.1} parent=5 // pred_fallthru
        _
      %p188 = scmp.le.s32.totalorder 1, %s17
      %p189 = scmp.lt.s32.totalorder %s17, 9
      %p190 = pnand %p188, %p189
      %p191 = pneg %p190
      // Predicated region
      $region25: #{tpu_custom_call.1} parent=5 // pred_check
        _
      $region26: #{tpu_custom_call.1} parent=5 // pred_check_branch
        %193 = sbr.rel (%p190) target = $region28
      $region27: #{tpu_custom_call.1} parent=5 // pred_region
        %s194 = ssub.s32 %s17, 1
        %s195 = sand.u32 %s53, 1
        %s196 = scalar_lea.sflag [#allocation4], %s195
        %s197 = sand.u32 %s53, 1
        %s198 = smul.addr %s197, 16
        %s199 = scalar_lea.vmem [#allocation3], %s198
        // Predicated region
        $region29: #{tpu_custom_call.1} parent=27 // pred_check
          %p200 = pneg %p66
        $region30: #{tpu_custom_call.1} parent=27 // pred_check_branch
          %202 = sbr.rel (%p200) target = $region32
        $region31: #{tpu_custom_call.1} parent=27 // pred_region
          %204 = dma.done %s196, 256
        $region32: #{tpu_custom_call.1} parent=27 // pred_fallthru
          _
        %s205 = sand.u32 %s79, 1
        %s206 = scalar_lea.sflag [#allocation7], %s205
        %s207 = sand.u32 %s79, 1
        %s208 = smul.addr %s207, 768
        %s209 = scalar_lea.vmem [#allocation6], %s208
        // Predicated region
        $region33: #{tpu_custom_call.1} parent=27 // pred_check
          %p210 = pneg %p92
        $region34: #{tpu_custom_call.1} parent=27 // pred_check_branch
          %212 = sbr.rel (%p210) target = $region36
        $region35: #{tpu_custom_call.1} parent=27 // pred_region
          %214 = dma.done %s206, 12288
        $region36: #{tpu_custom_call.1} parent=27 // pred_fallthru
          _
        %s215 = sand.u32 %s53, 1
        %s216 = scalar_lea.sflag [#allocation4], %s215
        %s217 = sand.u32 %s53, 1
        %s218 = smul.addr %s217, 16
        %s219 = scalar_lea.vmem [#allocation3], %s218
        %p220 = pneg %p66
        %p221 = pneg %p63
        %s222 = sand.u32 %s79, 1
        %s223 = scalar_lea.sflag [#allocation7], %s222
        %s224 = sand.u32 %s79, 1
        %s225 = smul.addr %s224, 768
        %s226 = scalar_lea.vmem [#allocation6], %s225
        %p227 = pneg %p92
        %p228 = pneg %p89
        %p229 = pneg %p120
        %p230 = pneg %p117
        %s231 = sand.u32 %s107, 1
        %s232 = scalar_lea.sflag [#allocation5], %s231
        %s233 = sand.u32 %s107, 1
        %s234 = smul.addr %s233, 96
        %s235 = scalar_lea.vmem [#allocation8], %s234
        %s236 = smul.u32 2, %s28
        %s237 = smul.u32 16, %s29
        %s238 = smul.u32 2, %s28
        %p239 = scmp.eq.s32.totalorder %s29, 0
        // Predicated region
        $region37: #{tpu_custom_call.1} parent=27 // pred_check
          %p240 = pneg %p239
        $region38: #{tpu_custom_call.1} parent=27 // pred_check_branch
          %242 = sbr.rel (%p240) target = $region40
        $region39: #{tpu_custom_call.1} parent=27 // pred_region
          %243 = vst [vmem:[#allocation2] sm:$0xff] 0.0
          %244 = vst [vmem:[#allocation2 + $0x8] sm:$0xff] 0.0
          %245 = vst [vmem:[#allocation2 + $0x10] sm:$0xff] 0.0
          %246 = vst [vmem:[#allocation2 + $0x18] sm:$0xff] 0.0
          %247 = vst [vmem:[#allocation2 + $0x20] sm:$0xff] 0.0
          %248 = vst [vmem:[#allocation2 + $0x28] sm:$0xff] 0.0
          %249 = vst [vmem:[#allocation2 + $0x30] sm:$0xff] 0.0
          %250 = vst [vmem:[#allocation2 + $0x38] sm:$0xff] 0.0
          %251 = vst [vmem:[#allocation2 + $0x40] sm:$0xff] 0.0
          %252 = vst [vmem:[#allocation2 + $0x48] sm:$0xff] 0.0
          %253 = vst [vmem:[#allocation2 + $0x50] sm:$0xff] 0.0
          %254 = vst [vmem:[#allocation2 + $0x58] sm:$0xff] 0.0
        $region40: #{tpu_custom_call.1} parent=27 // pred_fallthru
          _
        %v255 = vld [vmem:[#allocation2] sm:$0xff]
        %v256 = vld [vmem:[#allocation2 + $0x8] sm:$0xff]
        %v257 = vld [vmem:[#allocation2 + $0x10] sm:$0xff]
        %v258 = vld [vmem:[#allocation2 + $0x18] sm:$0xff]
        %v259 = vld [vmem:[#allocation2 + $0x20] sm:$0xff]
        %v260 = vld [vmem:[#allocation2 + $0x28] sm:$0xff]
        %v261 = vld [vmem:[#allocation2 + $0x30] sm:$0xff]
        %v262 = vld [vmem:[#allocation2 + $0x38] sm:$0xff]
        %v263 = vld [vmem:[#allocation2 + $0x40] sm:$0xff]
        %v264 = vld [vmem:[#allocation2 + $0x48] sm:$0xff]
        %v265 = vld [vmem:[#allocation2 + $0x50] sm:$0xff]
        %v266 = vld [vmem:[#allocation2 + $0x58] sm:$0xff]
        %v267 = vld [vmem:[%s199] sm:$0xff]
        %v268 = vld [vmem:[%s199 + $0x8] sm:$0xff]
        %v269 = vld [vmem:[%s209] sm:$0xff]
        %v270 = vld [vmem:[%s209 + $0x8] sm:$0xff]
        %v271 = vld [vmem:[%s209 + $0x10] sm:$0xff]
        %v272 = vld [vmem:[%s209 + $0x18] sm:$0xff]
        %v273 = vld [vmem:[%s209 + $0x20] sm:$0xff]
        %v274 = vld [vmem:[%s209 + $0x28] sm:$0xff]
        %v275 = vld [vmem:[%s209 + $0x30] sm:$0xff]
        %v276 = vld [vmem:[%s209 + $0x38] sm:$0xff]
        %v277 = vld [vmem:[%s209 + $0x40] sm:$0xff]
        %v278 = vld [vmem:[%s209 + $0x48] sm:$0xff]
        %v279 = vld [vmem:[%s209 + $0x50] sm:$0xff]
        %v280 = vld [vmem:[%s209 + $0x58] sm:$0xff]
        %v281 = vld [vmem:[%s209 + $0x60] sm:$0xff]
        %v282 = vld [vmem:[%s209 + $0x68] sm:$0xff]
        %v283 = vld [vmem:[%s209 + $0x70] sm:$0xff]
        %v284 = vld [vmem:[%s209 + $0x78] sm:$0xff]
        %v285 = vld [vmem:[%s209 + $0x80] sm:$0xff]
        %v286 = vld [vmem:[%s209 + $0x88] sm:$0xff]
        %v287 = vld [vmem:[%s209 + $0x90] sm:$0xff]
        %v288 = vld [vmem:[%s209 + $0x98] sm:$0xff]
        %v289 = vld [vmem:[%s209 + $0xa0] sm:$0xff]
        %v290 = vld [vmem:[%s209 + $0xa8] sm:$0xff]
        %v291 = vld [vmem:[%s209 + $0xb0] sm:$0xff]
        %v292 = vld [vmem:[%s209 + $0xb8] sm:$0xff]
        %v293 = vld [vmem:[%s209 + $0xc0] sm:$0xff]
        %v294 = vld [vmem:[%s209 + $0xc8] sm:$0xff]
        %v295 = vld [vmem:[%s209 + $0xd0] sm:$0xff]
        %v296 = vld [vmem:[%s209 + $0xd8] sm:$0xff]
        %v297 = vld [vmem:[%s209 + $0xe0] sm:$0xff]
        %v298 = vld [vmem:[%s209 + $0xe8] sm:$0xff]
        %v299 = vld [vmem:[%s209 + $0xf0] sm:$0xff]
        %v300 = vld [vmem:[%s209 + $0xf8] sm:$0xff]
        %v301 = vld [vmem:[%s209 + $0x100] sm:$0xff]
        %v302 = vld [vmem:[%s209 + $0x108] sm:$0xff]
        %v303 = vld [vmem:[%s209 + $0x110] sm:$0xff]
        %v304 = vld [vmem:[%s209 + $0x118] sm:$0xff]
        %v305 = vld [vmem:[%s209 + $0x120] sm:$0xff]
        %v306 = vld [vmem:[%s209 + $0x128] sm:$0xff]
        %v307 = vld [vmem:[%s209 + $0x130] sm:$0xff]
        %v308 = vld [vmem:[%s209 + $0x138] sm:$0xff]
        %v309 = vld [vmem:[%s209 + $0x140] sm:$0xff]
        %v310 = vld [vmem:[%s209 + $0x148] sm:$0xff]
        %v311 = vld [vmem:[%s209 + $0x150] sm:$0xff]
        %v312 = vld [vmem:[%s209 + $0x158] sm:$0xff]
        %v313 = vld [vmem:[%s209 + $0x160] sm:$0xff]
        %v314 = vld [vmem:[%s209 + $0x168] sm:$0xff]
        %v315 = vld [vmem:[%s209 + $0x170] sm:$0xff]
        %v316 = vld [vmem:[%s209 + $0x178] sm:$0xff]
        %v317 = vld [vmem:[%s209 + $0x180] sm:$0xff]
        %v318 = vld [vmem:[%s209 + $0x188] sm:$0xff]
        %v319 = vld [vmem:[%s209 + $0x190] sm:$0xff]
        %v320 = vld [vmem:[%s209 + $0x198] sm:$0xff]
        %v321 = vld [vmem:[%s209 + $0x1a0] sm:$0xff]
        %v322 = vld [vmem:[%s209 + $0x1a8] sm:$0xff]
        %v323 = vld [vmem:[%s209 + $0x1b0] sm:$0xff]
        %v324 = vld [vmem:[%s209 + $0x1b8] sm:$0xff]
        %v325 = vld [vmem:[%s209 + $0x1c0] sm:$0xff]
        %v326 = vld [vmem:[%s209 + $0x1c8] sm:$0xff]
        %v327 = vld [vmem:[%s209 + $0x1d0] sm:$0xff]
        %v328 = vld [vmem:[%s209 + $0x1d8] sm:$0xff]
        %v329 = vld [vmem:[%s209 + $0x1e0] sm:$0xff]
        %v330 = vld [vmem:[%s209 + $0x1e8] sm:$0xff]
        %v331 = vld [vmem:[%s209 + $0x1f0] sm:$0xff]
        %v332 = vld [vmem:[%s209 + $0x1f8] sm:$0xff]
        %v333 = vld [vmem:[%s209 + $0x200] sm:$0xff]
        %v334 = vld [vmem:[%s209 + $0x208] sm:$0xff]
        %v335 = vld [vmem:[%s209 + $0x210] sm:$0xff]
        %v336 = vld [vmem:[%s209 + $0x218] sm:$0xff]
        %v337 = vld [vmem:[%s209 + $0x220] sm:$0xff]
        %v338 = vld [vmem:[%s209 + $0x228] sm:$0xff]
        %v339 = vld [vmem:[%s209 + $0x230] sm:$0xff]
        %v340 = vld [vmem:[%s209 + $0x238] sm:$0xff]
        %v341 = vld [vmem:[%s209 + $0x240] sm:$0xff]
        %v342 = vld [vmem:[%s209 + $0x248] sm:$0xff]
        %v343 = vld [vmem:[%s209 + $0x250] sm:$0xff]
        %v344 = vld [vmem:[%s209 + $0x258] sm:$0xff]
        %v345 = vld [vmem:[%s209 + $0x260] sm:$0xff]
        %v346 = vld [vmem:[%s209 + $0x268] sm:$0xff]
        %v347 = vld [vmem:[%s209 + $0x270] sm:$0xff]
        %v348 = vld [vmem:[%s209 + $0x278] sm:$0xff]
        %v349 = vld [vmem:[%s209 + $0x280] sm:$0xff]
        %v350 = vld [vmem:[%s209 + $0x288] sm:$0xff]
        %v351 = vld [vmem:[%s209 + $0x290] sm:$0xff]
        %v352 = vld [vmem:[%s209 + $0x298] sm:$0xff]
        %v353 = vld [vmem:[%s209 + $0x2a0] sm:$0xff]
        %v354 = vld [vmem:[%s209 + $0x2a8] sm:$0xff]
        %v355 = vld [vmem:[%s209 + $0x2b0] sm:$0xff]
        %v356 = vld [vmem:[%s209 + $0x2b8] sm:$0xff]
        %v357 = vld [vmem:[%s209 + $0x2c0] sm:$0xff]
        %v358 = vld [vmem:[%s209 + $0x2c8] sm:$0xff]
        %v359 = vld [vmem:[%s209 + $0x2d0] sm:$0xff]
        %v360 = vld [vmem:[%s209 + $0x2d8] sm:$0xff]
        %v361 = vld [vmem:[%s209 + $0x2e0] sm:$0xff]
        %v362 = vld [vmem:[%s209 + $0x2e8] sm:$0xff]
        %v363 = vld [vmem:[%s209 + $0x2f0] sm:$0xff]
        %v364 = vld [vmem:[%s209 + $0x2f8] sm:$0xff]
        %365 = vmatpush.msra.mxu0 %v359
        %366 = vmatpush.msra.mxu0 %v353
        %367 = vmatpush.msra.mxu0 %v347
        %368 = vmatpush.msra.mxu0 %v341
        %369 = vmatpush.msra.mxu0 %v335
        %370 = vmatpush.msra.mxu0 %v329
        %371 = vmatpush.msra.mxu0 %v323
        %372 = vmatpush.msra.mxu0 %v317
        %373 = vmatpush.msra.mxu0 %v311
        %374 = vmatpush.msra.mxu0 %v305
        %375 = vmatpush.msra.mxu0 %v299
        %376 = vmatpush.msra.mxu0 %v293
        %377 = vmatpush.msra.mxu0 %v287
        %378 = vmatpush.msra.mxu0 %v281
        %379 = vmatpush.msra.mxu0 %v275
        %380 = vmatpush.msra.mxu0 %v269
        %381 = vmatmul.f32.gmra.mxu0 %v267
        %v382 = vpop.f32.mrf.mxu0
        %v383 = vadd.f32 0.0, %v382
        %384 = vmatmul.f32.gmra.mxu0 %v268
        %v385 = vpop.f32.mrf.mxu0
        %v386 = vadd.f32 0.0, %v385
        %387 = vdwg.mxu0
        %388 = vmatpush.msra.mxu0 %v360
        %389 = vmatpush.msra.mxu0 %v354
        %390 = vmatpush.msra.mxu0 %v348
        %391 = vmatpush.msra.mxu0 %v342
        %392 = vmatpush.msra.mxu0 %v336
        %393 = vmatpush.msra.mxu0 %v330
        %394 = vmatpush.msra.mxu0 %v324
        %395 = vmatpush.msra.mxu0 %v318
        %396 = vmatpush.msra.mxu0 %v312
        %397 = vmatpush.msra.mxu0 %v306
        %398 = vmatpush.msra.mxu0 %v300
        %399 = vmatpush.msra.mxu0 %v294
        %400 = vmatpush.msra.mxu0 %v288
        %401 = vmatpush.msra.mxu0 %v282
        %402 = vmatpush.msra.mxu0 %v276
        %403 = vmatpush.msra.mxu0 %v270
        %404 = vmatmul.f32.gmra.mxu0 %v267
        %v405 = vpop.f32.mrf.mxu0
        %v406 = vadd.f32 0.0, %v405
        %407 = vmatmul.f32.gmra.mxu0 %v268
        %v408 = vpop.f32.mrf.mxu0
        %v409 = vadd.f32 0.0, %v408
        %410 = vdwg.mxu0
        %411 = vmatpush.msra.mxu0 %v361
        %412 = vmatpush.msra.mxu0 %v355
        %413 = vmatpush.msra.mxu0 %v349
        %414 = vmatpush.msra.mxu0 %v343
        %415 = vmatpush.msra.mxu0 %v337
        %416 = vmatpush.msra.mxu0 %v331
        %417 = vmatpush.msra.mxu0 %v325
        %418 = vmatpush.msra.mxu0 %v319
        %419 = vmatpush.msra.mxu0 %v313
        %420 = vmatpush.msra.mxu0 %v307
        %421 = vmatpush.msra.mxu0 %v301
        %422 = vmatpush.msra.mxu0 %v295
        %423 = vmatpush.msra.mxu0 %v289
        %424 = vmatpush.msra.mxu0 %v283
        %425 = vmatpush.msra.mxu0 %v277
        %426 = vmatpush.msra.mxu0 %v271
        %427 = vmatmul.f32.gmra.mxu0 %v267
        %v428 = vpop.f32.mrf.mxu0
        %v429 = vadd.f32 0.0, %v428
        %430 = vmatmul.f32.gmra.mxu0 %v268
        %v431 = vpop.f32.mrf.mxu0
        %v432 = vadd.f32 0.0, %v431
        %433 = vdwg.mxu0
        %434 = vmatpush.msra.mxu0 %v362
        %435 = vmatpush.msra.mxu0 %v356
        %436 = vmatpush.msra.mxu0 %v350
        %437 = vmatpush.msra.mxu0 %v344
        %438 = vmatpush.msra.mxu0 %v338
        %439 = vmatpush.msra.mxu0 %v332
        %440 = vmatpush.msra.mxu0 %v326
        %441 = vmatpush.msra.mxu0 %v320
        %442 = vmatpush.msra.mxu0 %v314
        %443 = vmatpush.msra.mxu0 %v308
        %444 = vmatpush.msra.mxu0 %v302
        %445 = vmatpush.msra.mxu0 %v296
        %446 = vmatpush.msra.mxu0 %v290
        %447 = vmatpush.msra.mxu0 %v284
        %448 = vmatpush.msra.mxu0 %v278
        %449 = vmatpush.msra.mxu0 %v272
        %450 = vmatmul.f32.gmra.mxu0 %v267
        %v451 = vpop.f32.mrf.mxu0
        %v452 = vadd.f32 0.0, %v451
        %453 = vmatmul.f32.gmra.mxu0 %v268
        %v454 = vpop.f32.mrf.mxu0
        %v455 = vadd.f32 0.0, %v454
        %456 = vdwg.mxu0
        %457 = vmatpush.msra.mxu0 %v363
        %458 = vmatpush.msra.mxu0 %v357
        %459 = vmatpush.msra.mxu0 %v351
        %460 = vmatpush.msra.mxu0 %v345
        %461 = vmatpush.msra.mxu0 %v339
        %462 = vmatpush.msra.mxu0 %v333
        %463 = vmatpush.msra.mxu0 %v327
        %464 = vmatpush.msra.mxu0 %v321
        %465 = vmatpush.msra.mxu0 %v315
        %466 = vmatpush.msra.mxu0 %v309
        %467 = vmatpush.msra.mxu0 %v303
        %468 = vmatpush.msra.mxu0 %v297
        %469 = vmatpush.msra.mxu0 %v291
        %470 = vmatpush.msra.mxu0 %v285
        %471 = vmatpush.msra.mxu0 %v279
        %472 = vmatpush.msra.mxu0 %v273
        %473 = vmatmul.f32.gmra.mxu0 %v267
        %v474 = vpop.f32.mrf.mxu0
        %v475 = vadd.f32 0.0, %v474
        %476 = vmatmul.f32.gmra.mxu0 %v268
        %v477 = vpop.f32.mrf.mxu0
        %v478 = vadd.f32 0.0, %v477
        %479 = vdwg.mxu0
        %480 = vmatpush.msra.mxu0 %v364
        %481 = vmatpush.msra.mxu0 %v358
        %482 = vmatpush.msra.mxu0 %v352
        %483 = vmatpush.msra.mxu0 %v346
        %484 = vmatpush.msra.mxu0 %v340
        %485 = vmatpush.msra.mxu0 %v334
        %486 = vmatpush.msra.mxu0 %v328
        %487 = vmatpush.msra.mxu0 %v322
        %488 = vmatpush.msra.mxu0 %v316
        %489 = vmatpush.msra.mxu0 %v310
        %490 = vmatpush.msra.mxu0 %v304
        %491 = vmatpush.msra.mxu0 %v298
        %492 = vmatpush.msra.mxu0 %v292
        %493 = vmatpush.msra.mxu0 %v286
        %494 = vmatpush.msra.mxu0 %v280
        %495 = vmatpush.msra.mxu0 %v274
        %496 = vmatmul.f32.gmra.mxu0 %v267
        %v497 = vpop.f32.mrf.mxu0
        %v498 = vadd.f32 0.0, %v497
        %499 = vmatmul.f32.gmra.mxu0 %v268
        %v500 = vpop.f32.mrf.mxu0
        %v501 = vadd.f32 0.0, %v500
        %502 = vdwg.mxu0
        %v503 = vadd.f32 %v255, %v383
        %v504 = vadd.f32 %v256, %v406
        %v505 = vadd.f32 %v257, %v429
        %v506 = vadd.f32 %v258, %v452
        %v507 = vadd.f32 %v259, %v475
        %v508 = vadd.f32 %v260, %v498
        %v509 = vadd.f32 %v261, %v386
        %v510 = vadd.f32 %v262, %v409
        %v511 = vadd.f32 %v263, %v432
        %v512 = vadd.f32 %v264, %v455
        %v513 = vadd.f32 %v265, %v478
        %v514 = vadd.f32 %v266, %v501
        %515 = vst [vmem:[#allocation2] sm:$0xff] %v503
        %516 = vst [vmem:[#allocation2 + $0x8] sm:$0xff] %v504
        %517 = vst [vmem:[#allocation2 + $0x10] sm:$0xff] %v505
        %518 = vst [vmem:[#allocation2 + $0x18] sm:$0xff] %v506
        %519 = vst [vmem:[#allocation2 + $0x20] sm:$0xff] %v507
        %520 = vst [vmem:[#allocation2 + $0x28] sm:$0xff] %v508
        %521 = vst [vmem:[#allocation2 + $0x30] sm:$0xff] %v509
        %522 = vst [vmem:[#allocation2 + $0x38] sm:$0xff] %v510
        %523 = vst [vmem:[#allocation2 + $0x40] sm:$0xff] %v511
        %524 = vst [vmem:[#allocation2 + $0x48] sm:$0xff] %v512
        %525 = vst [vmem:[#allocation2 + $0x50] sm:$0xff] %v513
        %526 = vst [vmem:[#allocation2 + $0x58] sm:$0xff] %v514
        %p527 = scmp.eq.s32.totalorder %s29, 1
        // Predicated region
        $region41: #{tpu_custom_call.1} parent=27 // pred_check
          %p528 = pneg %p527
        $region42: #{tpu_custom_call.1} parent=27 // pred_check_branch
          %530 = sbr.rel (%p528) target = $region44
        $region43: #{tpu_custom_call.1} parent=27 // pred_region
          %v531 = vld [vmem:[#allocation2] sm:$0xff]
          %v532 = vld [vmem:[#allocation2 + $0x8] sm:$0xff]
          %v533 = vld [vmem:[#allocation2 + $0x10] sm:$0xff]
          %v534 = vld [vmem:[#allocation2 + $0x18] sm:$0xff]
          %v535 = vld [vmem:[#allocation2 + $0x20] sm:$0xff]
          %v536 = vld [vmem:[#allocation2 + $0x28] sm:$0xff]
          %v537 = vld [vmem:[#allocation2 + $0x30] sm:$0xff]
          %v538 = vld [vmem:[#allocation2 + $0x38] sm:$0xff]
          %v539 = vld [vmem:[#allocation2 + $0x40] sm:$0xff]
          %v540 = vld [vmem:[#allocation2 + $0x48] sm:$0xff]
          %v541 = vld [vmem:[#allocation2 + $0x50] sm:$0xff]
          %v542 = vld [vmem:[#allocation2 + $0x58] sm:$0xff]
          %543 = vst [vmem:[%s235] sm:$0xff] %v531
          %544 = vst [vmem:[%s235 + $0x8] sm:$0xff] %v532
          %545 = vst [vmem:[%s235 + $0x10] sm:$0xff] %v533
          %546 = vst [vmem:[%s235 + $0x18] sm:$0xff] %v534
          %547 = vst [vmem:[%s235 + $0x20] sm:$0xff] %v535
          %548 = vst [vmem:[%s235 + $0x28] sm:$0xff] %v536
          %549 = vst [vmem:[%s235 + $0x30] sm:$0xff] %v537
          %550 = vst [vmem:[%s235 + $0x38] sm:$0xff] %v538
          %551 = vst [vmem:[%s235 + $0x40] sm:$0xff] %v539
          %552 = vst [vmem:[%s235 + $0x48] sm:$0xff] %v540
          %553 = vst [vmem:[%s235 + $0x50] sm:$0xff] %v541
          %554 = vst [vmem:[%s235 + $0x58] sm:$0xff] %v542
        $region44: #{tpu_custom_call.1} parent=27 // pred_fallthru
          _
        %s555 = sand.u32 %s107, 1
        %s556 = scalar_lea.sflag [#allocation5], %s555
        %s557 = sand.u32 %s107, 1
        %s558 = smul.addr %s557, 96
        %s559 = scalar_lea.vmem [#allocation8], %s558
        // Predicated region
        $region45: #{tpu_custom_call.1} parent=27 // pred_check
          %p560 = pneg %p117
        $region46: #{tpu_custom_call.1} parent=27 // pred_check_branch
          %562 = sbr.rel (%p560) target = $region48
        $region47: #{tpu_custom_call.1} parent=27 // pred_region
          %s563 = smul.u32 2, %s28
          %565 = vsyncadd %s556, 0
          %s566 = smul.addr %s563, 6
          %s567 = smul.addr %s27, 24
          %s568 = sadd.s32 %s566, %s567
          %s569 = smul.addr %s568, 8
          %s570 = scalar_lea.hbm %s2, %s569
          %s571 = sshll.u32 %s559, 4
          %s572 = int_to_ptr.vmem [resolvable:$true] %s571
          %s573 = sshll.u32 %s570, 4
          %s574 = int_to_ptr.hbm [resolvable:$true] %s573
          %579 = dma.vmem_to_hbm [thread:$0]  %s572, 1536, %s574, %s556, 768, 768, 48
        $region48: #{tpu_custom_call.1} parent=27 // pred_fallthru
          _
      $region28: #{tpu_custom_call.1} parent=5 // pred_fallthru
        _
      %p580 = scmp.le.s32.totalorder 2, %s17
      // Predicated region
      $region49: #{tpu_custom_call.1} parent=5 // pred_check
        %p581 = pneg %p580
      $region50: #{tpu_custom_call.1} parent=5 // pred_check_branch
        %583 = sbr.rel (%p581) target = $region52
      $region51: #{tpu_custom_call.1} parent=5 // pred_region
        %s584 = ssub.s32 %s17, 2
        // Predicated region
        $region53: #{tpu_custom_call.1} parent=51 // pred_check
          %p585 = pneg %p123
        $region54: #{tpu_custom_call.1} parent=51 // pred_check_branch
          %587 = sbr.rel (%p585) target = $region56
        $region55: #{tpu_custom_call.1} parent=51 // pred_region
          %s588 = sand.u32 %s108, 1
          %s589 = scalar_lea.sflag [#allocation5], %s588
          %s590 = sand.u32 %s108, 1
          %s591 = smul.addr %s590, 96
          %s592 = scalar_lea.vmem [#allocation8], %s591
          %594 = dma.done %s589, 1536
        $region56: #{tpu_custom_call.1} parent=51 // pred_fallthru
          _
      $region52: #{tpu_custom_call.1} parent=5 // pred_fallthru
        _
    $region6: #{tpu_custom_call.1} parent=1 // loop_footer
      %s21 = sadd.s32 1, %s17
    $region7: #{tpu_custom_call.1} parent=1 // loop_footer_branch
      %16 = sbr.rel target = $region3
    $region8: #{tpu_custom_call.1} parent=1 // loop_exit
      _
    %595 = vsyncpa [#allocation4], 1
    %s596 = scalar_lea.sflag [#allocation4], 1
    %597 = vsyncpa %s596, 1
    %598 = vsyncpa [#allocation7], 1
    %s599 = scalar_lea.sflag [#allocation7], 1
    %600 = vsyncpa %s599, 1
    %601 = vsyncpa [#allocation5], 1
    %s602 = scalar_lea.sflag [#allocation5], 1
    %603 = vsyncpa %s602, 1

</llo_original>
